<compile_context>
chip_gen: v6e
topology: v6e:2x2x1
jax: 0.10.0
libtpu: 0.0.40
codegen_flags: <defaults>
</compile_context>

<pallas_src>
import numpy as np
from typing import NamedTuple

import jax
import jax.numpy as jnp
from jax.experimental import pallas as pl
from jax.experimental.pallas import tpu as pltpu


VMEM_LIMIT_BYTES = 48 * 1024 * 1024   # above v5e's 16MiB / v6e-v7x's 32MiB scoped defaults
TILE_VMEM_BUDGET = 24 * 1024 * 1024   # target working-set for tile sizing (headroom under limit)


def _round_up(x, m):
    return ((x + m - 1) // m) * m


def _choose_tiles(n_dst, n_src, d, max_tn=512, max_tk=1024):
    """Pick dst (lane) tile tn and src (K) tile tk, VMEM-budget derived."""
    tn = min(max_tn, _round_up(n_dst, 128))
    # Keep >= 2 dst tiles where the dst axis allows it: the ("parallel",) dst
    # axis then shards across v7x's two TensorCores and the adjacency DMA of
    # tile i+1 overlaps the matmul of tile i.
    if _round_up(n_dst, 128) > 128:
        tn = min(tn, _round_up((n_dst + 1) // 2, 128))
    tk = min(max_tk, _round_up(n_src, 128))

    def footprint(tk_, tn_):
        return (2 * tk_ * tn_ * 2      # adjacency tile, bf16, double-buffered
                + 2 * d * tk_ * 2      # feature K-tile, bf16, double-buffered
                + 2 * d * tn_ * 4)     # f32 output/accumulator tile, double-buffered

    while footprint(tk, tn) > TILE_VMEM_BUDGET and tk > 128:
        tk = max(128, _round_up(tk // 2, 128))
    while footprint(tk, tn) > TILE_VMEM_BUDGET and tn > 128:
        tn = max(128, _round_up(tn // 2, 128))
    return tn, tk


class _PreparedGroup(NamedTuple):
    adj_t: jax.Array        # (n_src_p, n_dst_p) bf16, transposed + zero-padded adjacency
    ktile_ids: jax.Array    # (grid_n, max_nnz) int32: nonzero K-tile ids per dst tile
    ktile_cnt: jax.Array    # (grid_n,) int32: number of nonzero K tiles per dst tile
    tn: int
    tk: int
    grid_n: int
    max_nnz: int
    n_src: int
    n_src_p: int
    n_dst: int
    n_dst_p: int
    slices: tuple           # ((dst_type, start, stop), ...) rows of the fused dst axis


def _prepare_group(rels, d, max_tn, max_tk):
    """One-time per source type (hoisted out of forward): stack relations along
    the dst axis, transpose, cast to bf16, pad to tile multiples, and build the
    tile-CSR (nonzero K tiles per dst tile) schedule on the host."""
    adj_np = np.concatenate(
        [np.asarray(jax.device_get(a), dtype=np.float32) for _, a in rels], axis=0)
    n_dst, n_src = adj_np.shape
    tn, tk = _choose_tiles(n_dst, n_src, d, max_tn, max_tk)
    n_dst_p, n_src_p = _round_up(n_dst, tn), _round_up(n_src, tk)
    grid_n, grid_k = n_dst_p // tn, n_src_p // tk

    padded = np.zeros((n_dst_p, n_src_p), np.float32)
    padded[:n_dst, :n_src] = adj_np
    nnz = padded.reshape(grid_n, tn, grid_k, tk).any(axis=(1, 3))   # (grid_n, grid_k)
    max_nnz = max(1, int(nnz.sum(axis=1).max()))
    ids = np.zeros((grid_n, max_nnz), np.int32)
    cnt = np.zeros((grid_n,), np.int32)
    for j in range(grid_n):
        ks = np.nonzero(nnz[j])[0]
        cnt[j] = ks.size
        if ks.size:
            ids[j, :ks.size] = ks
            # padded schedule entries repeat the last valid tile id: the block
            # index does not change so NO extra DMA is issued for them, and the
            # kernel gates the compute off with k < cnt[j].
            ids[j, ks.size:] = ks[-1]

    adj_t = jnp.asarray(padded.T, dtype=jnp.bfloat16)   # 0/1 is exact in bf16

    slices, off = [], 0
    for dst_type, a in rels:
        slices.append((dst_type, off, off + a.shape[0]))
        off += a.shape[0]

    return _PreparedGroup(adj_t, jnp.asarray(ids), jnp.asarray(cnt), tn, tk,
                          grid_n, max_nnz, n_src, n_src_p, n_dst, n_dst_p,
                          tuple(slices))


def _spmm_t_kernel(ids_ref, cnt_ref, feat_ref, adj_ref, o_ref):
    """One (d, tn) += (d, tk) @ (tk, tn) MXU step of out^T = feat^T @ adj^T.

    The transposed formulation keeps the output lane dim = dst tile (multiple
    of 128) -> unmasked lane-dense stores.  The f32 output block itself is the
    accumulator across the (arbitrary, last) K schedule axis.
    """
    j = pl.program_id(0)
    k = pl.program_id(1)

    @pl.when(k == 0)
    def _init():
        o_ref[...] = jnp.zeros_like(o_ref)

    # Skip padded tile-CSR entries (their tile ids repeat the previous step's,
    # so no DMA was issued for them either).
    @pl.when(k < cnt_ref[j])
    def _accum():
        o_ref[...] += jnp.dot(feat_ref[...], adj_ref[...],
                              preferred_element_type=jnp.float32)


def _spmm_prepared(prep: _PreparedGroup, feat):
    """out[dst, :] = sum_src adj[dst, src] * feat[src, :] via the block-sparse
    transposed SpMM.  Returns (n_dst, d) float32."""
    n_src, d = feat.shape
    assert n_src == prep.n_src
    # Per-forward feature prep is tiny (d x n_src bf16); the big adjacency
    # stream was cast / padded / transposed once at graph-prepare time.
    feat_t = jnp.zeros((d, prep.n_src_p), jnp.bfloat16)
    feat_t = feat_t.at[:, :n_src].set(feat.astype(jnp.bfloat16).T)

    out_t = pl.pallas_call(
        _spmm_t_kernel,
        out_shape=jax.ShapeDtypeStruct((d, prep.n_dst_p), jnp.float32),
        grid_spec=pltpu.PrefetchScalarGridSpec(
            num_scalar_prefetch=2,                 # ktile_ids, ktile_cnt -> SMEM
            grid=(prep.grid_n, prep.max_nnz),      # dst tiles x max nonzero K tiles
            in_specs=[
                # feature K tile follows the same nonzero-tile schedule as the
                # adjacency (re-fetched only when the tile id changes; extra
                # HBM traffic ~ d/tn of the adjacency stream).
                pl.BlockSpec((d, prep.tk),
                             lambda j, k, ids, cnt: (0, ids[j, k])),
                # adjacency tile: data-dependent K index from the tile-CSR table
                pl.BlockSpec((prep.tk, prep.tn),
                             lambda j, k, ids, cnt: (ids[j, k], j)),
            ],
            out_specs=pl.BlockSpec((d, prep.tn),
                                   lambda j, k, ids, cnt: (0, j)),
        ),
        compiler_params=pltpu.CompilerParams(
            dimension_semantics=("parallel", "arbitrary"),
            vmem_limit_bytes=VMEM_LIMIT_BYTES),
    )(prep.ktile_ids, prep.ktile_cnt, feat_t, prep.adj_t)

    # Single small (d x n_dst) transpose back to the (N_dst, D) layout the
    # module returns; the kernel-side stores stay lane-dense.
    return out_t[:, :prep.n_dst].T


class RGCNPallas:
    """RGCN.forward (== conv1): TaxoHeteroGraphConv over {'writtenby','citeby'},
    each SimpleGraphConv(norm='sum', weight=False, bias=None), aggregate='sum'.
    weight=False / bias=None -> no parameters; output feature dim == in_feats."""

    def __init__(self, in_feats, hid_feats, out_feats=None, rel_names=(),
                 self_loop=None, max_tn=512, max_tk=1024):
        self.in_feats = in_feats
        self.hid_feats = hid_feats     # unused in forward: weight=False
        self.max_tn = max_tn
        self.max_tk = max_tk
        self._prep_cache = {}

    def prepare(self, graph):
        """One-time graph preprocessing (hoisted out of the per-forward path)."""
        by_src = {}
        for _rel, (stype, dtype, adj) in graph.items():
            by_src.setdefault(stype, []).append((dtype, adj))
        groups = {}
        for stype, rels in by_src.items():
            # mirror DGL: relations with zero edges are skipped
            rels = [(dt, a) for dt, a in rels
                    if bool(np.asarray(jax.device_get(a)).any())]
            if not rels:
                continue
            groups[stype] = _prepare_group(rels, self.in_feats,
                                           self.max_tn, self.max_tk)
        return groups

    def forward(self, graph, inputs, k=None):
        # TODO(synk): the edge-weight path of edge_udf (edges.data['w'][:, k])
        # is not modeled; `k` is accepted but ignored.  Exact for unweighted
        # copy_src + sum relations (the graphs used here have no edge weights).
        key = id(graph)
        if key not in self._prep_cache:
            self._prep_cache[key] = self.prepare(graph)
        groups = self._prep_cache[key]

        outputs = {}
        for stype, prep in groups.items():
            if stype not in inputs:
                continue
            fused = _spmm_prepared(prep, inputs[stype])   # (n_dst_total, d) f32
            for dst_type, start, stop in prep.slices:
                outputs.setdefault(dst_type, []).append(fused[start:stop])

        # HeteroGraphConv aggregate='sum'
        rsts = {}
        for nty, alist in outputs.items():
            acc = alist[0]
            for extra in alist[1:]:
                acc = acc + extra
            rsts[nty] = acc
        return rsts


if __name__ == "__main__":
    key = jax.random.PRNGKey(0)
    k1, k2, k3, k4, k5, k6 = jax.random.split(key, 6)

    # ------- test 1: the RGCN conv1 hetero graph (writtenby + citeby) -------
    N_PAPER, N_AUTHOR, IN_FEATS, HID_FEATS = 256, 128, 32, 32
    feats = {
        "paper": jax.random.normal(k1, (N_PAPER, IN_FEATS), jnp.float32),
        "author": jax.random.normal(k2, (N_AUTHOR, IN_FEATS), jnp.float32),
    }
    adj_writtenby = jax.random.bernoulli(
        k3, 0.05, (N_AUTHOR, N_PAPER)).astype(jnp.float32)   # paper -> author
    adj_citeby = jax.random.bernoulli(
        k4, 0.05, (N_PAPER, N_PAPER)).astype(jnp.float32)    # paper -> paper
    graph = {
        "writtenby": ("paper", "author", adj_writtenby),
        "citeby": ("paper", "paper", adj_citeby),
    }

    model = RGCNPallas(IN_FEATS, HID_FEATS)
    out = model.forward(graph, feats, k=0)
    out = jax.tree_util.tree_map(jax.block_until_ready, out)

    fp_bf = feats["paper"].astype(jnp.bfloat16)
    ref_bf = {
        "author": jnp.dot(adj_writtenby.astype(jnp.bfloat16), fp_bf,
                          preferred_element_type=jnp.float32),
        "paper": jnp.dot(adj_citeby.astype(jnp.bfloat16), fp_bf,
                         preferred_element_type=jnp.float32),
    }
    ref_f32 = {
        "author": adj_writtenby @ feats["paper"],
        "paper": adj_citeby @ feats["paper"],
    }
    for nty in ref_f32:
        assert out[nty].shape == ref_f32[nty].shape, nty
        assert out[nty].dtype == jnp.float32, nty
        assert jnp.allclose(out[nty], ref_bf[nty], atol=1e-3, rtol=1e-3), nty
        assert jnp.allclose(out[nty], ref_f32[nty], atol=5e-2, rtol=5e-2), nty

    # ------- test 2: block-structured graph exercising the tile-CSR skip -------
    # dst tile 1 (rows 256..383) has no edges into src K-tile 1 (cols 512..1023),
    # so that adjacency tile is never DMAed and its matmul is pl.when-skipped.
    N2_SRC, N2_DST = 1024, 384
    adj2 = jax.random.bernoulli(k5, 0.05, (N2_DST, N2_SRC)).astype(jnp.float32)
    adj2 = adj2.at[256:, 512:].set(0.0)
    feat2 = jax.random.normal(k6, (N2_SRC, IN_FEATS), jnp.float32)
    graph2 = {"writtenby": ("paper", "author", adj2)}

    model2 = RGCNPallas(IN_FEATS, HID_FEATS, max_tn=256, max_tk=512)
    out2 = model2.forward(graph2, {"paper": feat2}, k=0)
    out2 = jax.tree_util.tree_map(jax.block_until_ready, out2)

    prep2 = model2._prep_cache[id(graph2)]["paper"]
    assert prep2.max_nnz == 2 and int(prep2.ktile_cnt[1]) == 1  # skip path really used

    ref2_bf = jnp.dot(adj2.astype(jnp.bfloat16), feat2.astype(jnp.bfloat16),
                      preferred_element_type=jnp.float32)
    ref2_f32 = adj2 @ feat2
    assert out2["author"].shape == (N2_DST, IN_FEATS)
    assert jnp.allclose(out2["author"], ref2_bf, atol=1e-3, rtol=1e-3)
    # loose tolerance: features are rounded to bf16 before the MXU (tight check
    # above is against the bf16-rounded reference)
    assert jnp.allclose(out2["author"], ref2_f32, atol=1e-1, rtol=5e-2)

    print("KERNEL_OK")
</pallas_src>

<mosaic_0001>
module attributes {stable_mosaic.version = 11 : i64} {
  func.func @_spmm_t_kernel(%arg0: i32, %arg1: i32, %arg2: memref<2x1xi32, #tpu.memory_space<smem>>, %arg3: memref<2xi32, #tpu.memory_space<smem>>, %arg4: memref<32x256xbf16, #tpu.memory_space<vmem>>, %arg5: memref<256x256xbf16, #tpu.memory_space<vmem>>, %arg6: memref<32x256xf32, #tpu.memory_space<vmem>>) attributes {dimension_semantics = [#tpu.dimension_semantics<parallel>, #tpu.dimension_semantics<arbitrary>], iteration_bounds = array<i64: 2, 1>, scalar_prefetch = 2 : i64, scratch_operands = 0 : i64, tpu.core_type = #tpu.core_type<tc>, window_params = [{transform_indices = @transform_0, window_bounds = array<i64: 32, 256>}, {transform_indices = @transform_1, window_bounds = array<i64: 256, 256>}, {transform_indices = @transform_2, window_bounds = array<i64: 32, 256>}]} {
    %c0_i32 = arith.constant 0 : i32
    %0 = arith.cmpi eq, %arg1, %c0_i32 : i32
    %1 = arith.extui %0 : i1 to i32
    %c0_i32_0 = arith.constant 0 : i32
    %2 = arith.cmpi ne, %1, %c0_i32_0 : i32
    scf.if %2 {
      %cst = arith.constant 0.000000e+00 : f32
      %8 = vector.broadcast %cst : f32 to vector<32x256xf32>
      %c0 = arith.constant 0 : index
      %c0_2 = arith.constant 0 : index
      %9 = vector.load %arg6[%c0, %c0_2] : memref<32x256xf32, #tpu.memory_space<vmem>>, vector<32x256xf32>
      tpu.vector_store %arg6[%c0, %c0_2], %8 {strides = array<i32>} : memref<32x256xf32, #tpu.memory_space<vmem>>, vector<32x256xf32>,
    } else {
    }
    %3 = arith.index_cast %arg0 : i32 to index
    %4 = memref.load %arg3[%3] : memref<2xi32, #tpu.memory_space<smem>>
    %5 = arith.cmpi slt, %arg1, %4 : i32
    %6 = arith.extui %5 : i1 to i32
    %c0_i32_1 = arith.constant 0 : i32
    %7 = arith.cmpi ne, %6, %c0_i32_1 : i32
    scf.if %7 {
      %c0 = arith.constant 0 : index
      %c0_2 = arith.constant 0 : index
      %8 = vector.load %arg6[%c0, %c0_2] : memref<32x256xf32, #tpu.memory_space<vmem>>, vector<32x256xf32>
      %c0_3 = arith.constant 0 : index
      %c0_4 = arith.constant 0 : index
      %9 = vector.load %arg4[%c0_3, %c0_4] : memref<32x256xbf16, #tpu.memory_space<vmem>>, vector<32x256xbf16>
      %c0_5 = arith.constant 0 : index
      %c0_6 = arith.constant 0 : index
      %10 = vector.load %arg5[%c0_5, %c0_6] : memref<256x256xbf16, #tpu.memory_space<vmem>>, vector<256x256xbf16>
      %cst = arith.constant dense<0.000000e+00> : vector<32x256xf32>
      %11 = tpu.matmul %9, %10, %cst {dimension_numbers = #tpu.dot_dimension_numbers<[1], [0], [0], [1], [0, 0, 1, 1], [], []>} : vector<32x256xbf16>, vector<256x256xbf16>, vector<32x256xf32> -> vector<32x256xf32>
      %12 = arith.addf %8, %11 : vector<32x256xf32>
      %c0_7 = arith.constant 0 : index
      %c0_8 = arith.constant 0 : index
      %13 = vector.load %arg6[%c0_7, %c0_8] : memref<32x256xf32, #tpu.memory_space<vmem>>, vector<32x256xf32>
      tpu.vector_store %arg6[%c0_7, %c0_8], %12 {strides = array<i32>} : memref<32x256xf32, #tpu.memory_space<vmem>>, vector<32x256xf32>,
    } else {
    }
    return
  }
  func.func @transform_0(%arg0: i32, %arg1: i32, %arg2: memref<2x1xi32, #tpu.memory_space<smem>>, %arg3: memref<2xi32, #tpu.memory_space<smem>>) -> (i32, i32) {
    %0 = arith.index_cast %arg0 : i32 to index
    %1 = arith.index_cast %arg1 : i32 to index
    %2 = memref.load %arg2[%0, %1] : memref<2x1xi32, #tpu.memory_space<smem>>
    %c0_i32 = arith.constant 0 : i32
    %c0_i32_0 = arith.constant 0 : i32
    return %c0_i32, %2 : i32, i32
  }
  func.func @transform_1(%arg0: i32, %arg1: i32, %arg2: memref<2x1xi32, #tpu.memory_space<smem>>, %arg3: memref<2xi32, #tpu.memory_space<smem>>) -> (i32, i32) {
    %0 = arith.index_cast %arg0 : i32 to index
    %1 = arith.index_cast %arg1 : i32 to index
    %2 = memref.load %arg2[%0, %1] : memref<2x1xi32, #tpu.memory_space<smem>>
    %c0_i32 = arith.constant 0 : i32
    return %2, %arg0 : i32, i32
  }
  func.func @transform_2(%arg0: i32, %arg1: i32, %arg2: memref<2x1xi32, #tpu.memory_space<smem>>, %arg3: memref<2xi32, #tpu.memory_space<smem>>) -> (i32, i32) {
    %c0_i32 = arith.constant 0 : i32
    %c0_i32_0 = arith.constant 0 : i32
    return %c0_i32, %arg0 : i32, i32
  }
}

</mosaic_0001>

<llo_original>
// kernel: tpu_custom_call.1
$region0: #{tpu_custom_call.1}
  #allocation0 [shape = 'u32[]', space=smem, size = 0x4, offset = 0x4, fixed_abs, tag = 'smem constant byte address 0x4 - core index']
  #allocation1 [shape = 'u32[144,128]{1,0:T(1,128)}', space=vmem, size = 0x12000, scoped, tag = 'internal scratch']
  #allocation2 [shape = 's32[1]{0}', space=sflag, size = 0x4, scoped, tag = 'scoped memory for tpu_custom_call.1']
  #allocation3 [shape = 'u8[1024]{0}', space=smem, size = 0x400, scoped, tag = 'prefetched SMEM operand 0']
  #allocation4 [shape = 'u8[512]{0}', space=smem, size = 0x200, scoped, tag = 'prefetched SMEM operand 1']
  %s0 = inlined_call_operand.vmem [shape: s32[2,1], index: 0, kind: input, shape index: {}]
  %s1 = inlined_call_operand.vmem [shape: s32[2], index: 1, kind: input, shape index: {}]
  %s2 = inlined_call_operand.hbm [shape: bf16[32,256], index: 2, kind: input, shape index: {}]
  %s3 = inlined_call_operand.hbm [shape: bf16[256,512], index: 3, kind: input, shape index: {}]
  %s4 = inlined_call_operand.hbm [shape: f32[32,512], index: 4, kind: output, shape index: {}]
  %s5 = sld [smem:[#allocation0]]
  $region57: #{tpu_custom_call.1} parent=0
    _
  %s7 = ssub.s32 1, %s5
  %s8 = scalar_select 0, %s7, %s5
  %s9 = sshll.u32 %s0, 4
  %s10 = int_to_ptr.vmem [resolvable:$true] %s9
  %12 = dma.vmem_to_smem %s10, 32, [#allocation3], [#allocation2]
  %s13 = sshll.u32 %s1, 4
  %s14 = int_to_ptr.vmem [resolvable:$true] %s13
  %16 = dma.vmem_to_smem %s14, 16, [#allocation4], [#allocation2]
  %17 = dma.done [#allocation2], 48
  %18 = sfence
  $region1: #{tpu_custom_call.1} parent=0
    #allocation5 [shape = 'u8[32768]{0}', space=vmem, size = 0x8000, scoped, tag = 'input window, operand 2']
    #allocation6 [shape = 's32[2]{0}', space=sflag, size = 0x8, scoped, tag = 'scoped memory for tpu_custom_call.1']
    #allocation7 [shape = 's32[2]{0}', space=sflag, size = 0x8, scoped, tag = 'scoped memory for tpu_custom_call.1']
    #allocation8 [shape = 'u8[262144]{0}', space=vmem, size = 0x40000, scoped, tag = 'input window, operand 3']
    #allocation9 [shape = 's32[2]{0}', space=sflag, size = 0x8, scoped, tag = 'scoped memory for tpu_custom_call.1']
    #allocation10 [shape = 'u8[65536]{0}', space=vmem, size = 0x10000, scoped, tag = 'output window, operand 0']
    %19 = vsyncpa [#allocation6], 0
    %s20 = scalar_lea.sflag [#allocation6], 1
    %21 = vsyncpa %s20, 0
    %22 = vsyncpa [#allocation9], 0
    %s23 = scalar_lea.sflag [#allocation9], 1
    %24 = vsyncpa %s23, 0
    %25 = vsyncpa [#allocation7], 0
    %s26 = scalar_lea.sflag [#allocation7], 1
    %27 = vsyncpa %s26, 0
    loop: start=0, step=1, limit=4
    $region2: #{tpu_custom_call.1} parent=1 // loop_pre_header
      _
    $region3: #{tpu_custom_call.1} parent=1 // loop_header
      %s29 = sphi 0, %s33
      %p30 = scmp.ge.s32.totalorder %s29, 4
      %s36 = sphi 0, %s48
      %s37 = sphi 0, %s44
      %s38 = sphi 0, %s36
      %s39 = sphi 0, %s37
      %s40 = sphi 0, %s38
      %s41 = sphi 0, %s39
      %s67 = sphi 0, %s69
      %s70 = sphi 0, %s67
      %s71 = sphi 0, %s70
      %s87 = sphi 0, %s71
      %s111 = sphi 0, %s113
      %s114 = sphi 0, %s111
      %s115 = sphi 0, %s114
      %s131 = sphi 0, %s115
      %s137 = sphi 0, %s139
      %s140 = sphi 0, %s137
      %s141 = sphi 0, %s140
      %s157 = sphi 0, %s141
    $region4: #{tpu_custom_call.1} parent=1 // loop_header_branch
      %32 = sbr.rel (%p30) target = $region8
    $region5: #{tpu_custom_call.1} parent=1 // loop_body
      %s34 = ssub.s32 %s29, 1
      %s35 = ssub.s32 %s29, 2
      %s42 = sadd.s32 1, %s37
      %p43 = scmp.ge.s32.totalorder %s42, 1
      %s44 = scalar_select %p43, 0, %s42
      %s45 = sadd.s32 1, %s36
      %s46 = scalar_select %p43, %s45, %s36
      %p47 = scmp.ge.s32.totalorder %s46, 2
      %s48 = scalar_select %p47, 0, %s46
      %s49 = sshra.s32 %s37, 7
      %s50 = sand.u32 %s37, 127
      %s51 = sadd.s32 %s49, %s36
      %s52 = smul.u32 %s51, 128
      %s53 = sshra.s32 %s37, 7
      %s54 = sand.u32 %s37, 127
      %s55 = sadd.s32 %s52, %s54
      %s56 = sld [smem:[#allocation3 + %s55]]
      %s57 = sshra.s32 %s44, 7
      %s58 = sand.u32 %s44, 127
      %s59 = sadd.s32 %s57, %s48
      %s60 = smul.u32 %s59, 128
      %s61 = sshra.s32 %s44, 7
      %s62 = sand.u32 %s44, 127
      %s63 = sadd.s32 %s60, %s62
      %s64 = sld [smem:[#allocation3 + %s63]]
      %s65 = ssub.s32 %s56, %s64
      %p66 = scmp.eq.s32.totalorder %s65, 0
      %s68 = sadd.s32 %s67, 1
      %s69 = scalar_select %p66, %s67, %s68
      %p72 = pneg %p66
      %p73 = scmp.eq.s32.totalorder %s29, 1
      %p74 = por %p72, %p73
      %p75 = scmp.ne.s32.totalorder %s67, %s70
      %p76 = scmp.eq.s32.totalorder %s29, 0
      %p77 = por %p75, %p76
      %p78 = scmp.ne.s32.totalorder %s67, %s70
      %p79 = scmp.eq.s32.totalorder %s34, 1
      %p80 = por %p78, %p79
      %p81 = scmp.ne.s32.totalorder %s70, %s71
      %p82 = scmp.eq.s32.totalorder %s34, 0
      %p83 = por %p81, %p82
      %p84 = scmp.ne.s32.totalorder %s70, %s71
      %p85 = scmp.eq.s32.totalorder %s35, 1
      %p86 = por %p84, %p85
      %p88 = scmp.ne.s32.totalorder %s71, %s87
      %p89 = scmp.eq.s32.totalorder %s35, 0
      %p90 = por %p88, %p89
      %s91 = sshra.s32 %s37, 7
      %s92 = sand.u32 %s37, 127
      %s93 = sadd.s32 %s91, %s36
      %s94 = smul.u32 %s93, 128
      %s95 = sshra.s32 %s37, 7
      %s96 = sand.u32 %s37, 127
      %s97 = sadd.s32 %s94, %s96
      %s98 = sld [smem:[#allocation3 + %s97]]
      %s99 = sshra.s32 %s44, 7
      %s100 = sand.u32 %s44, 127
      %s101 = sadd.s32 %s99, %s48
      %s102 = smul.u32 %s101, 128
      %s103 = sshra.s32 %s44, 7
      %s104 = sand.u32 %s44, 127
      %s105 = sadd.s32 %s102, %s104
      %s106 = sld [smem:[#allocation3 + %s105]]
      %s107 = ssub.s32 %s98, %s106
      %s108 = ssub.s32 %s36, %s48
      %s109 = sor.u32 %s107, %s108
      %p110 = scmp.eq.s32.totalorder %s109, 0
      %s112 = sadd.s32 %s111, 1
      %s113 = scalar_select %p110, %s111, %s112
      %p116 = pneg %p110
      %p117 = scmp.eq.s32.totalorder %s29, 1
      %p118 = por %p116, %p117
      %p119 = scmp.ne.s32.totalorder %s111, %s114
      %p120 = scmp.eq.s32.totalorder %s29, 0
      %p121 = por %p119, %p120
      %p122 = scmp.ne.s32.totalorder %s111, %s114
      %p123 = scmp.eq.s32.totalorder %s34, 1
      %p124 = por %p122, %p123
      %p125 = scmp.ne.s32.totalorder %s114, %s115
      %p126 = scmp.eq.s32.totalorder %s34, 0
      %p127 = por %p125, %p126
      %p128 = scmp.ne.s32.totalorder %s114, %s115
      %p129 = scmp.eq.s32.totalorder %s35, 1
      %p130 = por %p128, %p129
      %p132 = scmp.ne.s32.totalorder %s115, %s131
      %p133 = scmp.eq.s32.totalorder %s35, 0
      %p134 = por %p132, %p133
      %s135 = ssub.s32 %s36, %s48
      %p136 = scmp.eq.s32.totalorder %s135, 0
      %s138 = sadd.s32 %s137, 1
      %s139 = scalar_select %p136, %s137, %s138
      %p142 = pneg %p136
      %p143 = scmp.eq.s32.totalorder %s29, 1
      %p144 = por %p142, %p143
      %p145 = scmp.ne.s32.totalorder %s137, %s140
      %p146 = scmp.eq.s32.totalorder %s29, 0
      %p147 = por %p145, %p146
      %p148 = scmp.ne.s32.totalorder %s137, %s140
      %p149 = scmp.eq.s32.totalorder %s34, 1
      %p150 = por %p148, %p149
      %p151 = scmp.ne.s32.totalorder %s140, %s141
      %p152 = scmp.eq.s32.totalorder %s34, 0
      %p153 = por %p151, %p152
      %p154 = scmp.ne.s32.totalorder %s140, %s141
      %p155 = scmp.eq.s32.totalorder %s35, 1
      %p156 = por %p154, %p155
      %p158 = scmp.ne.s32.totalorder %s141, %s157
      %p159 = scmp.eq.s32.totalorder %s35, 0
      %p160 = por %p158, %p159
      %p161 = scmp.le.s32.totalorder 1, %s29
      %p162 = scmp.lt.s32.totalorder %s29, 3
      %p163 = pnand %p161, %p162
      %p164 = pneg %p163
      // Predicated region
      $region9: #{tpu_custom_call.1} parent=5 // pred_check
        _
      $region10: #{tpu_custom_call.1} parent=5 // pred_check_branch
        %166 = sbr.rel (%p163) target = $region12
      $region11: #{tpu_custom_call.1} parent=5 // pred_region
        %s167 = ssub.s32 %s29, 1
      $region12: #{tpu_custom_call.1} parent=5 // pred_fallthru
        _
      %p168 = scmp.lt.s32.totalorder %s29, 2
      // Predicated region
      $region13: #{tpu_custom_call.1} parent=5 // pred_check
        %p169 = pneg %p168
      $region14: #{tpu_custom_call.1} parent=5 // pred_check_branch
        %171 = sbr.rel (%p169) target = $region16
      $region15: #{tpu_custom_call.1} parent=5 // pred_region
        // Predicated region
        $region17: #{tpu_custom_call.1} parent=15 // pred_check
          %p172 = pneg %p77
        $region18: #{tpu_custom_call.1} parent=15 // pred_check_branch
          %174 = sbr.rel (%p172) target = $region20
        $region19: #{tpu_custom_call.1} parent=15 // pred_region
          %s175 = sand.u32 %s67, 1
          %s176 = scalar_lea.sflag [#allocation6], %s175
          %s177 = sand.u32 %s67, 1
          %s178 = smul.addr %s177, 32
          %s179 = scalar_lea.vmem [#allocation5], %s178
          %s180 = sshra.s32 %s37, 7
          %s181 = sand.u32 %s37, 127
          %s182 = sadd.s32 %s180, %s36
          %s183 = smul.u32 %s182, 128
          %s184 = sshra.s32 %s37, 7
          %s185 = sand.u32 %s37, 127
          %s186 = sadd.s32 %s183, %s185
          %s187 = sld [smem:[#allocation3 + %s186]]
          %s188 = smul.u32 2, %s187
          %s190 = ssub.s32 512, 512
          %191 = vsyncadd %s176, %s190
          %s192 = smul.addr %s188, 64
          %s193 = scalar_lea.hbm %s2, %s192
          %s194 = sshll.u32 %s179, 4
          %s195 = int_to_ptr.vmem [resolvable:$true] %s194
          %200 = dma.hbm_to_vmem [thread:$0]  %s193, 512, %s195, %s176, 128, 128, 8
        $region20: #{tpu_custom_call.1} parent=15 // pred_fallthru
          _
        // Predicated region
        $region21: #{tpu_custom_call.1} parent=15 // pred_check
          %p201 = pneg %p121
        $region22: #{tpu_custom_call.1} parent=15 // pred_check_branch
          %203 = sbr.rel (%p201) target = $region24
        $region23: #{tpu_custom_call.1} parent=15 // pred_region
          %s204 = sand.u32 %s111, 1
          %s205 = scalar_lea.sflag [#allocation9], %s204
          %s206 = sand.u32 %s111, 1
          %s207 = smul.addr %s206, 256
          %s208 = scalar_lea.vmem [#allocation8], %s207
          %s209 = sshra.s32 %s37, 7
          %s210 = sand.u32 %s37, 127
          %s211 = sadd.s32 %s209, %s36
          %s212 = smul.u32 %s211, 128
          %s213 = sshra.s32 %s37, 7
          %s214 = sand.u32 %s37, 127
          %s215 = sadd.s32 %s212, %s214
          %s216 = sld [smem:[#allocation3 + %s215]]
          %s217 = smul.u32 32, %s216
          %s218 = smul.u32 2, %s36
          %s220 = ssub.s32 4096, 4096
          %221 = vsyncadd %s205, %s220
          %s222 = smul.addr %s217, 4
          %s223 = sadd.s32 %s218, %s222
          %s224 = smul.addr %s223, 64
          %s225 = scalar_lea.hbm %s3, %s224
          %s226 = sshll.u32 %s208, 4
          %s227 = int_to_ptr.vmem [resolvable:$true] %s226
          %232 = dma.hbm_to_vmem [thread:$0]  %s225, 4096, %s227, %s205, 256, 128, 8
        $region24: #{tpu_custom_call.1} parent=15 // pred_fallthru
          _
      $region16: #{tpu_custom_call.1} parent=5 // pred_fallthru
        _
      %p233 = scmp.le.s32.totalorder 1, %s29
      %p234 = scmp.lt.s32.totalorder %s29, 3
      %p235 = pnand %p233, %p234
      %p236 = pneg %p235
      // Predicated region
      $region25: #{tpu_custom_call.1} parent=5 // pred_check
        _
      $region26: #{tpu_custom_call.1} parent=5 // pred_check_branch
        %238 = sbr.rel (%p235) target = $region28
      $region27: #{tpu_custom_call.1} parent=5 // pred_region
        %s239 = ssub.s32 %s29, 1
        %s240 = sand.u32 %s70, 1
        %s241 = scalar_lea.sflag [#allocation6], %s240
        %s242 = sand.u32 %s70, 1
        %s243 = smul.addr %s242, 32
        %s244 = scalar_lea.vmem [#allocation5], %s243
        // Predicated region
        $region29: #{tpu_custom_call.1} parent=27 // pred_check
          %p245 = pneg %p83
        $region30: #{tpu_custom_call.1} parent=27 // pred_check_branch
          %247 = sbr.rel (%p245) target = $region32
        $region31: #{tpu_custom_call.1} parent=27 // pred_region
          %248 = dma.done %s241, 512
        $region32: #{tpu_custom_call.1} parent=27 // pred_fallthru
          _
        %s249 = sand.u32 %s114, 1
        %s250 = scalar_lea.sflag [#allocation9], %s249
        %s251 = sand.u32 %s114, 1
        %s252 = smul.addr %s251, 256
        %s253 = scalar_lea.vmem [#allocation8], %s252
        // Predicated region
        $region33: #{tpu_custom_call.1} parent=27 // pred_check
          %p254 = pneg %p127
        $region34: #{tpu_custom_call.1} parent=27 // pred_check_branch
          %256 = sbr.rel (%p254) target = $region36
        $region35: #{tpu_custom_call.1} parent=27 // pred_region
          %257 = dma.done %s250, 4096
        $region36: #{tpu_custom_call.1} parent=27 // pred_fallthru
          _
        %s258 = sand.u32 %s70, 1
        %s259 = scalar_lea.sflag [#allocation6], %s258
        %s260 = sand.u32 %s70, 1
        %s261 = smul.addr %s260, 32
        %s262 = scalar_lea.vmem [#allocation5], %s261
        %p263 = pneg %p83
        %p264 = pneg %p80
        %s265 = sand.u32 %s114, 1
        %s266 = scalar_lea.sflag [#allocation9], %s265
        %s267 = sand.u32 %s114, 1
        %s268 = smul.addr %s267, 256
        %s269 = scalar_lea.vmem [#allocation8], %s268
        %p270 = pneg %p127
        %p271 = pneg %p124
        %p272 = pneg %p153
        %p273 = pneg %p150
        %s274 = sand.u32 %s140, 1
        %s275 = scalar_lea.sflag [#allocation7], %s274
        %s276 = sand.u32 %s140, 1
        %s277 = smul.addr %s276, 64
        %s278 = scalar_lea.vmem [#allocation10], %s277
        %s279 = sshra.s32 %s39, 7
        %s280 = sand.u32 %s39, 127
        %s281 = sadd.s32 %s279, %s38
        %s282 = smul.u32 %s281, 128
        %s283 = sshra.s32 %s39, 7
        %s284 = sand.u32 %s39, 127
        %s285 = sadd.s32 %s282, %s284
        %s286 = sld [smem:[#allocation3 + %s285]]
        %s287 = smul.u32 2, %s286
        %s288 = sshra.s32 %s39, 7
        %s289 = sand.u32 %s39, 127
        %s290 = sadd.s32 %s288, %s38
        %s291 = smul.u32 %s290, 128
        %s292 = sshra.s32 %s39, 7
        %s293 = sand.u32 %s39, 127
        %s294 = sadd.s32 %s291, %s293
        %s295 = sld [smem:[#allocation3 + %s294]]
        %s296 = smul.u32 32, %s295
        %s297 = smul.u32 2, %s38
        %s298 = smul.u32 2, %s38
        %p299 = scmp.eq.s32.totalorder %s39, 0
        // Predicated region
        $region37: #{tpu_custom_call.1} parent=27 // pred_check
          %p300 = pneg %p299
        $region38: #{tpu_custom_call.1} parent=27 // pred_check_branch
          %302 = sbr.rel (%p300) target = $region40
        $region39: #{tpu_custom_call.1} parent=27 // pred_region
          %303 = vst [vmem:[%s278] sm:$0xff] 0.0
          %304 = vst [vmem:[%s278 + $0x8] sm:$0xff] 0.0
          %305 = vst [vmem:[%s278 + $0x10] sm:$0xff] 0.0
          %306 = vst [vmem:[%s278 + $0x18] sm:$0xff] 0.0
          %307 = vst [vmem:[%s278 + $0x20] sm:$0xff] 0.0
          %308 = vst [vmem:[%s278 + $0x28] sm:$0xff] 0.0
          %309 = vst [vmem:[%s278 + $0x30] sm:$0xff] 0.0
          %310 = vst [vmem:[%s278 + $0x38] sm:$0xff] 0.0
        $region40: #{tpu_custom_call.1} parent=27 // pred_fallthru
          _
        %s311 = sld [smem:[#allocation4 + %s38]]
        %p312 = scmp.lt.s32.totalorder %s39, %s311
        // Predicated region
        $region41: #{tpu_custom_call.1} parent=27 // pred_check
          %p313 = pneg %p312
        $region42: #{tpu_custom_call.1} parent=27 // pred_check_branch
          %315 = sbr.rel (%p313) target = $region44
        $region43: #{tpu_custom_call.1} parent=27 // pred_region
          %v316 = vld [vmem:[%s278] sm:$0xff]
          %v317 = vld [vmem:[%s278 + $0x8] sm:$0xff]
          %v318 = vld [vmem:[%s278 + $0x10] sm:$0xff]
          %v319 = vld [vmem:[%s278 + $0x18] sm:$0xff]
          %v320 = vld [vmem:[%s278 + $0x20] sm:$0xff]
          %v321 = vld [vmem:[%s278 + $0x28] sm:$0xff]
          %v322 = vld [vmem:[%s278 + $0x30] sm:$0xff]
          %v323 = vld [vmem:[%s278 + $0x38] sm:$0xff]
          %v324 = vld [vmem:[%s244] sm:$0xff]
          %v325 = vld [vmem:[%s244 + $0x8] sm:$0xff]
          %v326 = vld [vmem:[%s244 + $0x10] sm:$0xff]
          %v327 = vld [vmem:[%s244 + $0x18] sm:$0xff]
          %v328 = vld [vmem:[%s253] sm:$0xff]
          %v329 = vld [vmem:[%s253 + $0x8] sm:$0xff]
          %v330 = vld [vmem:[%s253 + $0x10] sm:$0xff]
          %v331 = vld [vmem:[%s253 + $0x18] sm:$0xff]
          %v332 = vld [vmem:[%s253 + $0x20] sm:$0xff]
          %v333 = vld [vmem:[%s253 + $0x28] sm:$0xff]
          %v334 = vld [vmem:[%s253 + $0x30] sm:$0xff]
          %v335 = vld [vmem:[%s253 + $0x38] sm:$0xff]
          %v336 = vld [vmem:[%s253 + $0x40] sm:$0xff]
          %v337 = vld [vmem:[%s253 + $0x48] sm:$0xff]
          %v338 = vld [vmem:[%s253 + $0x50] sm:$0xff]
          %v339 = vld [vmem:[%s253 + $0x58] sm:$0xff]
          %v340 = vld [vmem:[%s253 + $0x60] sm:$0xff]
          %v341 = vld [vmem:[%s253 + $0x68] sm:$0xff]
          %v342 = vld [vmem:[%s253 + $0x70] sm:$0xff]
          %v343 = vld [vmem:[%s253 + $0x78] sm:$0xff]
          %v344 = vld [vmem:[%s253 + $0x80] sm:$0xff]
          %v345 = vld [vmem:[%s253 + $0x88] sm:$0xff]
          %v346 = vld [vmem:[%s253 + $0x90] sm:$0xff]
          %v347 = vld [vmem:[%s253 + $0x98] sm:$0xff]
          %v348 = vld [vmem:[%s253 + $0xa0] sm:$0xff]
          %v349 = vld [vmem:[%s253 + $0xa8] sm:$0xff]
          %v350 = vld [vmem:[%s253 + $0xb0] sm:$0xff]
          %v351 = vld [vmem:[%s253 + $0xb8] sm:$0xff]
          %v352 = vld [vmem:[%s253 + $0xc0] sm:$0xff]
          %v353 = vld [vmem:[%s253 + $0xc8] sm:$0xff]
          %v354 = vld [vmem:[%s253 + $0xd0] sm:$0xff]
          %v355 = vld [vmem:[%s253 + $0xd8] sm:$0xff]
          %v356 = vld [vmem:[%s253 + $0xe0] sm:$0xff]
          %v357 = vld [vmem:[%s253 + $0xe8] sm:$0xff]
          %v358 = vld [vmem:[%s253 + $0xf0] sm:$0xff]
          %v359 = vld [vmem:[%s253 + $0xf8] sm:$0xff]
          %v364 = vunpack.c.l.b16 %v324
          %v365 = vunpack.c.h.b16 %v324
          %v366 = vunpack.c.l.b16 %v325
          %v367 = vunpack.c.h.b16 %v325
          %v368 = vunpack.c.l.b16 %v326
          %v369 = vunpack.c.h.b16 %v326
          %v370 = vunpack.c.l.b16 %v327
          %v371 = vunpack.c.h.b16 %v327
          %v372 = vpack.c.b16 %v366, %v364
          %v373 = vpack.c.b16 %v367, %v365
          %v374 = vpack.c.b16 %v370, %v368
          %v375 = vpack.c.b16 %v371, %v369
          %v412 = vunpack.c.l.b16 %v328
          %v413 = vunpack.c.h.b16 %v328
          %v414 = vunpack.c.l.b16 %v329
          %v415 = vunpack.c.h.b16 %v329
          %v416 = vunpack.c.l.b16 %v330
          %v417 = vunpack.c.h.b16 %v330
          %v418 = vunpack.c.l.b16 %v331
          %v419 = vunpack.c.h.b16 %v331
          %v420 = vunpack.c.l.b16 %v332
          %v421 = vunpack.c.h.b16 %v332
          %v422 = vunpack.c.l.b16 %v333
          %v423 = vunpack.c.h.b16 %v333
          %v424 = vunpack.c.l.b16 %v334
          %v425 = vunpack.c.h.b16 %v334
          %v426 = vunpack.c.l.b16 %v335
          %v427 = vunpack.c.h.b16 %v335
          %v428 = vunpack.c.l.b16 %v336
          %v429 = vunpack.c.h.b16 %v336
          %v430 = vunpack.c.l.b16 %v337
          %v431 = vunpack.c.h.b16 %v337
          %v432 = vunpack.c.l.b16 %v338
          %v433 = vunpack.c.h.b16 %v338
          %v434 = vunpack.c.l.b16 %v339
          %v435 = vunpack.c.h.b16 %v339
          %v436 = vunpack.c.l.b16 %v340
          %v437 = vunpack.c.h.b16 %v340
          %v438 = vunpack.c.l.b16 %v341
          %v439 = vunpack.c.h.b16 %v341
          %v440 = vunpack.c.l.b16 %v342
          %v441 = vunpack.c.h.b16 %v342
          %v442 = vunpack.c.l.b16 %v343
          %v443 = vunpack.c.h.b16 %v343
          %v444 = vunpack.c.l.b16 %v344
          %v445 = vunpack.c.h.b16 %v344
          %v446 = vunpack.c.l.b16 %v345
          %v447 = vunpack.c.h.b16 %v345
          %v448 = vunpack.c.l.b16 %v346
          %v449 = vunpack.c.h.b16 %v346
          %v450 = vunpack.c.l.b16 %v347
          %v451 = vunpack.c.h.b16 %v347
          %v452 = vunpack.c.l.b16 %v348
          %v453 = vunpack.c.h.b16 %v348
          %v454 = vunpack.c.l.b16 %v349
          %v455 = vunpack.c.h.b16 %v349
          %v456 = vunpack.c.l.b16 %v350
          %v457 = vunpack.c.h.b16 %v350
          %v458 = vunpack.c.l.b16 %v351
          %v459 = vunpack.c.h.b16 %v351
          %v460 = vunpack.c.l.b16 %v352
          %v461 = vunpack.c.h.b16 %v352
          %v462 = vunpack.c.l.b16 %v353
          %v463 = vunpack.c.h.b16 %v353
          %v464 = vunpack.c.l.b16 %v354
          %v465 = vunpack.c.h.b16 %v354
          %v466 = vunpack.c.l.b16 %v355
          %v467 = vunpack.c.h.b16 %v355
          %v468 = vunpack.c.l.b16 %v356
          %v469 = vunpack.c.h.b16 %v356
          %v470 = vunpack.c.l.b16 %v357
          %v471 = vunpack.c.h.b16 %v357
          %v472 = vunpack.c.l.b16 %v358
          %v473 = vunpack.c.h.b16 %v358
          %v474 = vunpack.c.l.b16 %v359
          %v475 = vunpack.c.h.b16 %v359
          %v476 = vpack.c.b16 %v414, %v412
          %v477 = vpack.c.b16 %v415, %v413
          %v478 = vpack.c.b16 %v418, %v416
          %v479 = vpack.c.b16 %v419, %v417
          %v480 = vpack.c.b16 %v422, %v420
          %v481 = vpack.c.b16 %v423, %v421
          %v482 = vpack.c.b16 %v426, %v424
          %v483 = vpack.c.b16 %v427, %v425
          %v484 = vpack.c.b16 %v430, %v428
          %v485 = vpack.c.b16 %v431, %v429
          %v486 = vpack.c.b16 %v434, %v432
          %v487 = vpack.c.b16 %v435, %v433
          %v488 = vpack.c.b16 %v438, %v436
          %v489 = vpack.c.b16 %v439, %v437
          %v490 = vpack.c.b16 %v442, %v440
          %v491 = vpack.c.b16 %v443, %v441
          %v492 = vpack.c.b16 %v446, %v444
          %v493 = vpack.c.b16 %v447, %v445
          %v494 = vpack.c.b16 %v450, %v448
          %v495 = vpack.c.b16 %v451, %v449
          %v496 = vpack.c.b16 %v454, %v452
          %v497 = vpack.c.b16 %v455, %v453
          %v498 = vpack.c.b16 %v458, %v456
          %v499 = vpack.c.b16 %v459, %v457
          %v500 = vpack.c.b16 %v462, %v460
          %v501 = vpack.c.b16 %v463, %v461
          %v502 = vpack.c.b16 %v466, %v464
          %v503 = vpack.c.b16 %v467, %v465
          %v504 = vpack.c.b16 %v470, %v468
          %v505 = vpack.c.b16 %v471, %v469
          %v506 = vpack.c.b16 %v474, %v472
          %v507 = vpack.c.b16 %v475, %v473
          %540 = vmatprep.subr.bf16.mxu0 %v491
          %541 = vmatpush1.bf16.msra.mxu0 %v490
          %542 = vmatprep.subr.bf16.mxu0 %v489
          %543 = vmatpush1.bf16.msra.mxu0 %v488
          %544 = vmatprep.subr.bf16.mxu0 %v487
          %545 = vmatpush1.bf16.msra.mxu0 %v486
          %546 = vmatprep.subr.bf16.mxu0 %v485
          %547 = vmatpush1.bf16.msra.mxu0 %v484
          %548 = vmatprep.subr.bf16.mxu0 %v483
          %549 = vmatpush1.bf16.msra.mxu0 %v482
          %550 = vmatprep.subr.bf16.mxu0 %v481
          %551 = vmatpush1.bf16.msra.mxu0 %v480
          %552 = vmatprep.subr.bf16.mxu0 %v479
          %553 = vmatpush1.bf16.msra.mxu0 %v478
          %554 = vmatprep.subr.bf16.mxu0 %v477
          %555 = vmatpush1.bf16.msra.mxu0 %v476
          %556 = vmatprep.subr.bf16.mxu0 %v507
          %557 = vmatpush2.bf16.msra.mxu0 %v506
          %558 = vmatprep.subr.bf16.mxu0 %v505
          %559 = vmatpush2.bf16.msra.mxu0 %v504
          %560 = vmatprep.subr.bf16.mxu0 %v503
          %561 = vmatpush2.bf16.msra.mxu0 %v502
          %562 = vmatprep.subr.bf16.mxu0 %v501
          %563 = vmatpush2.bf16.msra.mxu0 %v500
          %564 = vmatprep.subr.bf16.mxu0 %v499
          %565 = vmatpush2.bf16.msra.mxu0 %v498
          %566 = vmatprep.subr.bf16.mxu0 %v497
          %567 = vmatpush2.bf16.msra.mxu0 %v496
          %568 = vmatprep.subr.bf16.mxu0 %v495
          %569 = vmatpush2.bf16.msra.mxu0 %v494
          %570 = vmatprep.subr.bf16.mxu0 %v493
          %571 = vmatpush2.bf16.msra.mxu0 %v492
          %572 = vmatprep.mubr.bf16.mxu0 %v373
          %573 = vmatmul.mubr.bf16.gmra.mxu0 %v372
          %v574 = vpop.f32.mrf.mxu0
          %v575 = vadd.f32 0.0, %v574
          %v576 = vpop.f32.mrf.mxu0
          %v577 = vadd.f32 0.0, %v576
          %v578 = vpop.f32.mrf.mxu0
          %v579 = vadd.f32 0.0, %v578
          %v580 = vpop.f32.mrf.mxu0
          %v581 = vadd.f32 0.0, %v580
          %582 = vmatprep.mubr.bf16.mxu0 %v375
          %583 = vmatmul.mubr.bf16.gmra.mxu0 %v374
          %v584 = vpop.f32.mrf.mxu0
          %v585 = vadd.f32 0.0, %v584
          %v586 = vpop.f32.mrf.mxu0
          %v587 = vadd.f32 0.0, %v586
          %v588 = vpop.f32.mrf.mxu0
          %v589 = vadd.f32 0.0, %v588
          %v590 = vpop.f32.mrf.mxu0
          %v591 = vadd.f32 0.0, %v590
          %592 = vdwg.mxu0
          %v593 = vadd.f32 %v316, %v575
          %v594 = vadd.f32 %v317, %v577
          %v595 = vadd.f32 %v318, %v579
          %v596 = vadd.f32 %v319, %v581
          %v597 = vadd.f32 %v320, %v585
          %v598 = vadd.f32 %v321, %v587
          %v599 = vadd.f32 %v322, %v589
          %v600 = vadd.f32 %v323, %v591
          %601 = vst [vmem:[%s278] sm:$0xff] %v593
          %602 = vst [vmem:[%s278 + $0x8] sm:$0xff] %v594
          %603 = vst [vmem:[%s278 + $0x10] sm:$0xff] %v595
          %604 = vst [vmem:[%s278 + $0x18] sm:$0xff] %v596
          %605 = vst [vmem:[%s278 + $0x20] sm:$0xff] %v597
          %606 = vst [vmem:[%s278 + $0x28] sm:$0xff] %v598
          %607 = vst [vmem:[%s278 + $0x30] sm:$0xff] %v599
          %608 = vst [vmem:[%s278 + $0x38] sm:$0xff] %v600
        $region44: #{tpu_custom_call.1} parent=27 // pred_fallthru
          _
        %s609 = sand.u32 %s140, 1
        %s610 = scalar_lea.sflag [#allocation7], %s609
        %s611 = sand.u32 %s140, 1
        %s612 = smul.addr %s611, 64
        %s613 = scalar_lea.vmem [#allocation10], %s612
        // Predicated region
        $region45: #{tpu_custom_call.1} parent=27 // pred_check
          %p614 = pneg %p150
        $region46: #{tpu_custom_call.1} parent=27 // pred_check_branch
          %616 = sbr.rel (%p614) target = $region48
        $region47: #{tpu_custom_call.1} parent=27 // pred_region
          %s617 = smul.u32 2, %s38
          %s619 = ssub.s32 1024, 1024
          %620 = vsyncadd %s610, %s619
          %s621 = smul.addr %s617, 128
          %s622 = scalar_lea.hbm %s4, %s621
          %s623 = sshll.u32 %s613, 4
          %s624 = int_to_ptr.vmem [resolvable:$true] %s623
          %629 = dma.vmem_to_hbm [thread:$0]  %s624, 1024, %s622, %s610, 256, 512, 16
        $region48: #{tpu_custom_call.1} parent=27 // pred_fallthru
          _
      $region28: #{tpu_custom_call.1} parent=5 // pred_fallthru
        _
      %p630 = scmp.le.s32.totalorder 2, %s29
      // Predicated region
      $region49: #{tpu_custom_call.1} parent=5 // pred_check
        %p631 = pneg %p630
      $region50: #{tpu_custom_call.1} parent=5 // pred_check_branch
        %633 = sbr.rel (%p631) target = $region52
      $region51: #{tpu_custom_call.1} parent=5 // pred_region
        %s634 = ssub.s32 %s29, 2
        // Predicated region
        $region53: #{tpu_custom_call.1} parent=51 // pred_check
          %p635 = pneg %p156
        $region54: #{tpu_custom_call.1} parent=51 // pred_check_branch
          %637 = sbr.rel (%p635) target = $region56
        $region55: #{tpu_custom_call.1} parent=51 // pred_region
          %s638 = sand.u32 %s141, 1
          %s639 = scalar_lea.sflag [#allocation7], %s638
          %s640 = sand.u32 %s141, 1
          %s641 = smul.addr %s640, 64
          %s642 = scalar_lea.vmem [#allocation10], %s641
          %643 = dma.done %s639, 1024
        $region56: #{tpu_custom_call.1} parent=51 // pred_fallthru
          _
      $region52: #{tpu_custom_call.1} parent=5 // pred_fallthru
        _
    $region6: #{tpu_custom_call.1} parent=1 // loop_footer
      %s33 = sadd.s32 1, %s29
    $region7: #{tpu_custom_call.1} parent=1 // loop_footer_branch
      %28 = sbr.rel target = $region3
    $region8: #{tpu_custom_call.1} parent=1 // loop_exit
      _
    %644 = vsyncpa [#allocation6], 1
    %s645 = scalar_lea.sflag [#allocation6], 1
    %646 = vsyncpa %s645, 1
    %647 = vsyncpa [#allocation9], 1
    %s648 = scalar_lea.sflag [#allocation9], 1
    %649 = vsyncpa %s648, 1
    %650 = vsyncpa [#allocation7], 1
    %s651 = scalar_lea.sflag [#allocation7], 1
    %652 = vsyncpa %s651, 1

</llo_original>
